<compile_context>
chip_gen: v6e
topology: v6e:2x2x1
jax: 0.10.0
libtpu: 0.0.40
codegen_flags: <defaults>
</compile_context>

<pallas_src>
import functools

import jax
import jax.numpy as jnp
from jax.experimental import pallas as pl
from jax.experimental.pallas import tpu as pltpu

INPUT_SIZE = 9
HIDDEN_SIZE = 128
OUTPUT_SIZE = 10

K_PAD = 16          # input feature dim padded 9 -> 16
LANE = 128          # lane-dense padded output width
BATCH = 512
BLOCK_ROWS = 256    # batch tile (rows per grid step)


def _mlp_kernel(x_ref, w1_ref, wp_ref, bp_ref, o_ref):
    # Layer 1: (TM, 16) @ (16, 128) + b1 -> ReLU   (zero-padded K rows are inert)
    h = jnp.dot(x_ref[...].astype(jnp.bfloat16), w1_ref[...],
                preferred_element_type=jnp.float32)
    h = jnp.maximum(h + bp_ref[0:1, :], 0.0)
    # Dropout(0.25): identity in eval mode.

    # Layer 2: (TM, 128) @ (128, 128) + b2 -> ReLU
    h = jnp.dot(h.astype(jnp.bfloat16), wp_ref[0],
                preferred_element_type=jnp.float32)
    h = jnp.maximum(h + bp_ref[1:2, :], 0.0)

    # Layer 3: (TM, 128) @ (128, 128) + b3 -> ReLU
    h = jnp.dot(h.astype(jnp.bfloat16), wp_ref[1],
                preferred_element_type=jnp.float32)
    h = jnp.maximum(h + bp_ref[2:3, :], 0.0)

    # Layer 4 (output head, zero-padded to 128 lanes, no activation)
    out = jnp.dot(h.astype(jnp.bfloat16), wp_ref[2],
                  preferred_element_type=jnp.float32) + bp_ref[3:4, :]
    o_ref[...] = out.astype(o_ref.dtype)


@functools.partial(jax.jit, static_argnames=("block_rows",))
def nn_forward(x, packed, *, block_rows=BLOCK_ROWS):
    """x: (B, INPUT_SIZE) float32; packed = pack_params(params). Returns (B, OUTPUT_SIZE)."""
    w1_p, wp, bp = packed
    B = x.shape[0]
    n_blocks = pl.cdiv(B, block_rows)
    b_pad = n_blocks * block_rows

    # Pad batch rows to a tile multiple and features 9 -> 16 (zeros).
    x_p = jnp.zeros((b_pad, K_PAD), jnp.float32).at[:B, :INPUT_SIZE].set(x)

    out_padded = pl.pallas_call(
        _mlp_kernel,
        out_shape=jax.ShapeDtypeStruct((b_pad, LANE), jnp.float32),
        grid=(n_blocks,),
        in_specs=[
            pl.BlockSpec((block_rows, K_PAD), lambda i: (i, 0)),          # x tile (pipelined)
            pl.BlockSpec((K_PAD, HIDDEN_SIZE), lambda i: (0, 0)),         # w1 (resident)
            pl.BlockSpec((3, HIDDEN_SIZE, LANE), lambda i: (0, 0, 0)),    # w2/w3/w4 slab (resident)
            pl.BlockSpec((4, LANE), lambda i: (0, 0)),                    # bias slab (resident)
        ],
        out_specs=pl.BlockSpec((block_rows, LANE), lambda i: (i, 0)),     # lane-dense output slab
        compiler_params=pltpu.CompilerParams(
            dimension_semantics=("parallel",)),                            # v7x dual-TC sharding
    )(x_p, w1_p, wp, bp)

    return out_padded[:B, :OUTPUT_SIZE]


def init_params(key):
    """nn.Linear-style init (uniform +/- 1/sqrt(fan_in)); weights stored (in, out)."""
    dims = [(INPUT_SIZE, HIDDEN_SIZE),
            (HIDDEN_SIZE, HIDDEN_SIZE),
            (HIDDEN_SIZE, HIDDEN_SIZE),
            (HIDDEN_SIZE, OUTPUT_SIZE)]
    params = []
    for fan_in, fan_out in dims:
        key, kw, kb = jax.random.split(key, 3)
        bound = 1.0 / float(fan_in) ** 0.5
        w = jax.random.uniform(kw, (fan_in, fan_out), jnp.float32, -bound, bound)
        b = jax.random.uniform(kb, (fan_out,), jnp.float32, -bound, bound)
        params += [w, b]
    return tuple(params)


def pack_params(params):
    """Pad/pack f32 master params into the kernel's operand layout."""
    w1, b1, w2, b2, w3, b3, w4, b4 = params
    # w1: K padded 9 -> 16 with zero rows, bf16.
    w1_p = jnp.zeros((K_PAD, HIDDEN_SIZE), jnp.float32).at[:INPUT_SIZE].set(w1)
    w1_p = w1_p.astype(jnp.bfloat16)
    # w4: lane-padded 10 -> 128 with zero columns; stack w2/w3/w4 into one bf16 slab.
    w4_p = jnp.zeros((HIDDEN_SIZE, LANE), jnp.float32).at[:, :OUTPUT_SIZE].set(w4)
    wp = jnp.stack([w2, w3, w4_p]).astype(jnp.bfloat16)
    # Biases packed into one (4, 128) f32 slab (b4 zero-padded).
    b4_p = jnp.zeros((LANE,), jnp.float32).at[:OUTPUT_SIZE].set(b4)
    bp = jnp.stack([b1, b2, b3, b4_p])
    return (w1_p, wp, bp)


def reference_forward_bf16(x, params):
    """Pure-JAX reference matching the kernel math (bf16 MXU inputs, f32 accum)."""
    w1, b1, w2, b2, w3, b3, w4, b4 = params

    def layer(h, w, b, relu):
        y = jnp.dot(h.astype(jnp.bfloat16), w.astype(jnp.bfloat16),
                    preferred_element_type=jnp.float32) + b
        return jnp.maximum(y, 0.0) if relu else y

    h = layer(x, w1, b1, True)
    h = layer(h, w2, b2, True)
    h = layer(h, w3, b3, True)
    return layer(h, w4, b4, False)


def reference_forward_f32(x, params):
    w1, b1, w2, b2, w3, b3, w4, b4 = params
    h = jnp.maximum(x @ w1 + b1, 0.0)
    h = jnp.maximum(h @ w2 + b2, 0.0)
    h = jnp.maximum(h @ w3 + b3, 0.0)
    return h @ w4 + b4


if __name__ == "__main__":
    key = jax.random.PRNGKey(0)
    key, kx = jax.random.split(key)
    x = jax.random.normal(kx, (BATCH, INPUT_SIZE), jnp.float32)
    params = init_params(key)
    packed = pack_params(params)

    out = nn_forward(x, packed)
    out = jax.block_until_ready(out)

    assert out.shape == (BATCH, OUTPUT_SIZE), out.shape
    ref_bf16 = reference_forward_bf16(x, params)
    assert jnp.allclose(out, ref_bf16, atol=1e-3, rtol=1e-3), "mismatch vs bf16-matched reference"
    ref_f32 = reference_forward_f32(x, params)
    assert jnp.allclose(out, ref_f32, atol=5e-2, rtol=5e-2), "mismatch vs f32 reference"

    print("KERNEL_OK")
</pallas_src>

<mosaic_0001>
module attributes {stable_mosaic.version = 11 : i64} {
  func.func @_mlp_kernel(%arg0: i32, %arg1: memref<256x16xf32, #tpu.memory_space<vmem>>, %arg2: memref<16x128xbf16, #tpu.memory_space<vmem>>, %arg3: memref<3x128x128xbf16, #tpu.memory_space<vmem>>, %arg4: memref<4x128xf32, #tpu.memory_space<vmem>>, %arg5: memref<256x128xf32, #tpu.memory_space<vmem>>) attributes {dimension_semantics = [#tpu.dimension_semantics<parallel>], iteration_bounds = array<i64: 2>, scalar_prefetch = 0 : i64, scratch_operands = 0 : i64, tpu.core_type = #tpu.core_type<tc>, window_params = [{transform_indices = @transform_0, window_bounds = array<i64: 256, 16>}, {pipeline_mode = #tpu.pipeline_mode<synchronous>, transform_indices = @transform_1, window_bounds = array<i64: 16, 128>}, {pipeline_mode = #tpu.pipeline_mode<synchronous>, transform_indices = @transform_2, window_bounds = array<i64: 3, 128, 128>}, {pipeline_mode = #tpu.pipeline_mode<synchronous>, transform_indices = @transform_3, window_bounds = array<i64: 4, 128>}, {transform_indices = @transform_4, window_bounds = array<i64: 256, 128>}]} {
    %c0 = arith.constant 0 : index
    %c0_0 = arith.constant 0 : index
    %0 = vector.load %arg1[%c0, %c0_0] : memref<256x16xf32, #tpu.memory_space<vmem>>, vector<256x16xf32>
    %1 = arith.truncf %0 : vector<256x16xf32> to vector<256x16xbf16>
    %c0_1 = arith.constant 0 : index
    %c0_2 = arith.constant 0 : index
    %2 = vector.load %arg2[%c0_1, %c0_2] : memref<16x128xbf16, #tpu.memory_space<vmem>>, vector<16x128xbf16>
    %cst = arith.constant dense<0.000000e+00> : vector<256x128xf32>
    %3 = tpu.matmul %1, %2, %cst {dimension_numbers = #tpu.dot_dimension_numbers<[1], [0], [0], [1], [0, 0, 1, 1], [], []>} : vector<256x16xbf16>, vector<16x128xbf16>, vector<256x128xf32> -> vector<256x128xf32>
    %c0_3 = arith.constant 0 : index
    %c0_4 = arith.constant 0 : index
    %4 = vector.load %arg4[%c0_3, %c0_4] : memref<4x128xf32, #tpu.memory_space<vmem>>, vector<1x128xf32>
    %5 = vector.broadcast %4 : vector<1x128xf32> to vector<256x128xf32>
    %6 = arith.addf %3, %5 : vector<256x128xf32>
    %cst_5 = arith.constant 0.000000e+00 : f32
    %7 = vector.broadcast %cst_5 : f32 to vector<256x128xf32>
    %8 = arith.maximumf %6, %7 : vector<256x128xf32>
    %9 = arith.truncf %8 : vector<256x128xf32> to vector<256x128xbf16>
    %c0_6 = arith.constant 0 : index
    %c0_7 = arith.constant 0 : index
    %c0_8 = arith.constant 0 : index
    %10 = vector.load %arg3[%c0_6, %c0_7, %c0_8] : memref<3x128x128xbf16, #tpu.memory_space<vmem>>, vector<1x128x128xbf16>
    %11 = vector.shape_cast %10 : vector<1x128x128xbf16> to vector<128x128xbf16>
    %cst_9 = arith.constant dense<0.000000e+00> : vector<256x128xf32>
    %12 = tpu.matmul %9, %11, %cst_9 {dimension_numbers = #tpu.dot_dimension_numbers<[1], [0], [0], [1], [0, 0, 1, 1], [], []>} : vector<256x128xbf16>, vector<128x128xbf16>, vector<256x128xf32> -> vector<256x128xf32>
    %c1 = arith.constant 1 : index
    %c0_10 = arith.constant 0 : index
    %13 = vector.load %arg4[%c1, %c0_10] : memref<4x128xf32, #tpu.memory_space<vmem>>, vector<1x128xf32>
    %14 = vector.broadcast %13 : vector<1x128xf32> to vector<256x128xf32>
    %15 = arith.addf %12, %14 : vector<256x128xf32>
    %cst_11 = arith.constant 0.000000e+00 : f32
    %16 = vector.broadcast %cst_11 : f32 to vector<256x128xf32>
    %17 = arith.maximumf %15, %16 : vector<256x128xf32>
    %18 = arith.truncf %17 : vector<256x128xf32> to vector<256x128xbf16>
    %c1_12 = arith.constant 1 : index
    %c0_13 = arith.constant 0 : index
    %c0_14 = arith.constant 0 : index
    %19 = vector.load %arg3[%c1_12, %c0_13, %c0_14] : memref<3x128x128xbf16, #tpu.memory_space<vmem>>, vector<1x128x128xbf16>
    %20 = vector.shape_cast %19 : vector<1x128x128xbf16> to vector<128x128xbf16>
    %cst_15 = arith.constant dense<0.000000e+00> : vector<256x128xf32>
    %21 = tpu.matmul %18, %20, %cst_15 {dimension_numbers = #tpu.dot_dimension_numbers<[1], [0], [0], [1], [0, 0, 1, 1], [], []>} : vector<256x128xbf16>, vector<128x128xbf16>, vector<256x128xf32> -> vector<256x128xf32>
    %c2 = arith.constant 2 : index
    %c0_16 = arith.constant 0 : index
    %22 = vector.load %arg4[%c2, %c0_16] : memref<4x128xf32, #tpu.memory_space<vmem>>, vector<1x128xf32>
    %23 = vector.broadcast %22 : vector<1x128xf32> to vector<256x128xf32>
    %24 = arith.addf %21, %23 : vector<256x128xf32>
    %cst_17 = arith.constant 0.000000e+00 : f32
    %25 = vector.broadcast %cst_17 : f32 to vector<256x128xf32>
    %26 = arith.maximumf %24, %25 : vector<256x128xf32>
    %27 = arith.truncf %26 : vector<256x128xf32> to vector<256x128xbf16>
    %c2_18 = arith.constant 2 : index
    %c0_19 = arith.constant 0 : index
    %c0_20 = arith.constant 0 : index
    %28 = vector.load %arg3[%c2_18, %c0_19, %c0_20] : memref<3x128x128xbf16, #tpu.memory_space<vmem>>, vector<1x128x128xbf16>
    %29 = vector.shape_cast %28 : vector<1x128x128xbf16> to vector<128x128xbf16>
    %cst_21 = arith.constant dense<0.000000e+00> : vector<256x128xf32>
    %30 = tpu.matmul %27, %29, %cst_21 {dimension_numbers = #tpu.dot_dimension_numbers<[1], [0], [0], [1], [0, 0, 1, 1], [], []>} : vector<256x128xbf16>, vector<128x128xbf16>, vector<256x128xf32> -> vector<256x128xf32>
    %c3 = arith.constant 3 : index
    %c0_22 = arith.constant 0 : index
    %31 = vector.load %arg4[%c3, %c0_22] : memref<4x128xf32, #tpu.memory_space<vmem>>, vector<1x128xf32>
    %32 = vector.broadcast %31 : vector<1x128xf32> to vector<256x128xf32>
    %33 = arith.addf %30, %32 : vector<256x128xf32>
    %c0_23 = arith.constant 0 : index
    %c0_24 = arith.constant 0 : index
    %34 = vector.load %arg5[%c0_23, %c0_24] : memref<256x128xf32, #tpu.memory_space<vmem>>, vector<256x128xf32>
    tpu.vector_store %arg5[%c0_23, %c0_24], %33 {strides = array<i32>} : memref<256x128xf32, #tpu.memory_space<vmem>>, vector<256x128xf32>,
    return
  }
  func.func @transform_0(%arg0: i32) -> (i32, i32) {
    %c0_i32 = arith.constant 0 : i32
    %c0_i32_0 = arith.constant 0 : i32
    return %arg0, %c0_i32 : i32, i32
  }
  func.func @transform_1(%arg0: i32) -> (i32, i32) {
    %c0_i32 = arith.constant 0 : i32
    %c0_i32_0 = arith.constant 0 : i32
    %c0_i32_1 = arith.constant 0 : i32
    return %c0_i32, %c0_i32_0 : i32, i32
  }
  func.func @transform_2(%arg0: i32) -> (i32, i32, i32) {
    %c0_i32 = arith.constant 0 : i32
    %c0_i32_0 = arith.constant 0 : i32
    %c0_i32_1 = arith.constant 0 : i32
    %c0_i32_2 = arith.constant 0 : i32
    return %c0_i32, %c0_i32_0, %c0_i32_1 : i32, i32, i32
  }
  func.func @transform_3(%arg0: i32) -> (i32, i32) {
    %c0_i32 = arith.constant 0 : i32
    %c0_i32_0 = arith.constant 0 : i32
    %c0_i32_1 = arith.constant 0 : i32
    return %c0_i32, %c0_i32_0 : i32, i32
  }
  func.func @transform_4(%arg0: i32) -> (i32, i32) {
    %c0_i32 = arith.constant 0 : i32
    %c0_i32_0 = arith.constant 0 : i32
    return %arg0, %c0_i32 : i32, i32
  }
}

</mosaic_0001>

<llo_original>
// kernel: nn_forward.1
$region0: #{nn_forward.1}
  #allocation0 [shape = 'u32[]', space=smem, size = 0x4, offset = 0x4, fixed_abs, tag = 'smem constant byte address 0x4 - core index']
  #allocation1 [shape = 'u32[144,128]{1,0:T(1,128)}', space=vmem, size = 0x12000, scoped, tag = 'internal scratch']
  %s0 = inlined_call_operand.vmem [shape: f32[512,16], index: 0, kind: input, shape index: {}]
  %s1 = inlined_call_operand.vmem [shape: bf16[16,128], index: 1, kind: input, shape index: {}]
  %s2 = inlined_call_operand.vmem [shape: bf16[3,128,128], index: 2, kind: input, shape index: {}]
  %s3 = inlined_call_operand.vmem [shape: f32[4,128], index: 3, kind: input, shape index: {}]
  %s4 = inlined_call_operand.vmem [shape: f32[512,128], index: 4, kind: output, shape index: {}]
  %s5 = sld [smem:[#allocation0]]
  $region49: #{nn_forward.1} parent=0
    _
  %s7 = ssub.s32 1, %s5
  %s8 = scalar_select 0, %s7, %s5
  loop: start=0, step=1, limit=4
  $region2: #{nn_forward.1} parent=0 // loop_pre_header
    _
  $region3: #{nn_forward.1} parent=0 // loop_header
    %s10 = sphi 0, %s14
    %p11 = scmp.ge.s32.totalorder %s10, 4
    %s20 = sphi 0, %s22
    %s23 = sphi 0, %s20
    %s24 = sphi 0, %s23
    %s40 = sphi 0, %s24
    %s44 = sphi 0, %s44
    %s46 = sphi 0, %s44
    %s47 = sphi 0, %s46
    %s61 = sphi 0, %s47
    %s65 = sphi 0, %s65
    %s67 = sphi 0, %s65
    %s68 = sphi 0, %s67
    %s82 = sphi 0, %s68
    %s86 = sphi 0, %s86
    %s88 = sphi 0, %s86
    %s89 = sphi 0, %s88
    %s103 = sphi 0, %s89
    %s109 = sphi 0, %s111
    %s112 = sphi 0, %s109
    %s113 = sphi 0, %s112
    %s129 = sphi 0, %s113
  $region4: #{nn_forward.1} parent=0 // loop_header_branch
    %13 = sbr.rel (%p11) target = $region8
  $region5: #{nn_forward.1} parent=0 // loop_body
    %s15 = ssub.s32 %s10, 1
    %s16 = ssub.s32 %s10, 2
    %s17 = sadd.s32 %s10, 1
    %s18 = ssub.s32 %s10, %s17
    %p19 = scmp.eq.s32.totalorder %s18, 0
    %s21 = sadd.s32 %s20, 1
    %s22 = scalar_select %p19, %s20, %s21
    %p25 = pneg %p19
    %p26 = scmp.eq.s32.totalorder %s10, 1
    %p27 = por %p25, %p26
    %p28 = scmp.ne.s32.totalorder %s20, %s23
    %p29 = scmp.eq.s32.totalorder %s10, 0
    %p30 = por %p28, %p29
    %p31 = scmp.ne.s32.totalorder %s20, %s23
    %p32 = scmp.eq.s32.totalorder %s15, 1
    %p33 = por %p31, %p32
    %p34 = scmp.ne.s32.totalorder %s23, %s24
    %p35 = scmp.eq.s32.totalorder %s15, 0
    %p36 = por %p34, %p35
    %p37 = scmp.ne.s32.totalorder %s23, %s24
    %p38 = scmp.eq.s32.totalorder %s16, 1
    %p39 = por %p37, %p38
    %p41 = scmp.ne.s32.totalorder %s24, %s40
    %p42 = scmp.eq.s32.totalorder %s16, 0
    %p43 = por %p41, %p42
    %s45 = sadd.s32 %s44, 1
    %p48 = scmp.eq.s32.totalorder %s10, 1
    %p49 = scmp.ne.s32.totalorder %s44, %s46
    %p50 = scmp.eq.s32.totalorder %s10, 0
    %p51 = por %p49, %p50
    %p52 = scmp.ne.s32.totalorder %s44, %s46
    %p53 = scmp.eq.s32.totalorder %s15, 1
    %p54 = por %p52, %p53
    %p55 = scmp.ne.s32.totalorder %s46, %s47
    %p56 = scmp.eq.s32.totalorder %s15, 0
    %p57 = por %p55, %p56
    %p58 = scmp.ne.s32.totalorder %s46, %s47
    %p59 = scmp.eq.s32.totalorder %s16, 1
    %p60 = por %p58, %p59
    %p62 = scmp.ne.s32.totalorder %s47, %s61
    %p63 = scmp.eq.s32.totalorder %s16, 0
    %p64 = por %p62, %p63
    %s66 = sadd.s32 %s65, 1
    %p69 = scmp.eq.s32.totalorder %s10, 1
    %p70 = scmp.ne.s32.totalorder %s65, %s67
    %p71 = scmp.eq.s32.totalorder %s10, 0
    %p72 = por %p70, %p71
    %p73 = scmp.ne.s32.totalorder %s65, %s67
    %p74 = scmp.eq.s32.totalorder %s15, 1
    %p75 = por %p73, %p74
    %p76 = scmp.ne.s32.totalorder %s67, %s68
    %p77 = scmp.eq.s32.totalorder %s15, 0
    %p78 = por %p76, %p77
    %p79 = scmp.ne.s32.totalorder %s67, %s68
    %p80 = scmp.eq.s32.totalorder %s16, 1
    %p81 = por %p79, %p80
    %p83 = scmp.ne.s32.totalorder %s68, %s82
    %p84 = scmp.eq.s32.totalorder %s16, 0
    %p85 = por %p83, %p84
    %s87 = sadd.s32 %s86, 1
    %p90 = scmp.eq.s32.totalorder %s10, 1
    %p91 = scmp.ne.s32.totalorder %s86, %s88
    %p92 = scmp.eq.s32.totalorder %s10, 0
    %p93 = por %p91, %p92
    %p94 = scmp.ne.s32.totalorder %s86, %s88
    %p95 = scmp.eq.s32.totalorder %s15, 1
    %p96 = por %p94, %p95
    %p97 = scmp.ne.s32.totalorder %s88, %s89
    %p98 = scmp.eq.s32.totalorder %s15, 0
    %p99 = por %p97, %p98
    %p100 = scmp.ne.s32.totalorder %s88, %s89
    %p101 = scmp.eq.s32.totalorder %s16, 1
    %p102 = por %p100, %p101
    %p104 = scmp.ne.s32.totalorder %s89, %s103
    %p105 = scmp.eq.s32.totalorder %s16, 0
    %p106 = por %p104, %p105
    %s107 = ssub.s32 %s10, %s17
    %p108 = scmp.eq.s32.totalorder %s107, 0
    %s110 = sadd.s32 %s109, 1
    %s111 = scalar_select %p108, %s109, %s110
    %p114 = pneg %p108
    %p115 = scmp.eq.s32.totalorder %s10, 1
    %p116 = por %p114, %p115
    %p117 = scmp.ne.s32.totalorder %s109, %s112
    %p118 = scmp.eq.s32.totalorder %s10, 0
    %p119 = por %p117, %p118
    %p120 = scmp.ne.s32.totalorder %s109, %s112
    %p121 = scmp.eq.s32.totalorder %s15, 1
    %p122 = por %p120, %p121
    %p123 = scmp.ne.s32.totalorder %s112, %s113
    %p124 = scmp.eq.s32.totalorder %s15, 0
    %p125 = por %p123, %p124
    %p126 = scmp.ne.s32.totalorder %s112, %s113
    %p127 = scmp.eq.s32.totalorder %s16, 1
    %p128 = por %p126, %p127
    %p130 = scmp.ne.s32.totalorder %s113, %s129
    %p131 = scmp.eq.s32.totalorder %s16, 0
    %p132 = por %p130, %p131
    %p133 = scmp.le.s32.totalorder 1, %s10
    %p134 = scmp.lt.s32.totalorder %s10, 3
    %p135 = pnand %p133, %p134
    %p136 = pneg %p135
    // Predicated region
    $region9: #{nn_forward.1} parent=5 // pred_check
      _
    $region10: #{nn_forward.1} parent=5 // pred_check_branch
      %138 = sbr.rel (%p135) target = $region12
    $region11: #{nn_forward.1} parent=5 // pred_region
      %s139 = ssub.s32 %s10, 1
      // Predicated region
      $region13: #{nn_forward.1} parent=11 // pred_check
        %p140 = pneg %p57
      $region14: #{nn_forward.1} parent=11 // pred_check_branch
        %142 = sbr.rel (%p140) target = $region16
      $region15: #{nn_forward.1} parent=11 // pred_region
        _
      $region16: #{nn_forward.1} parent=11 // pred_fallthru
        _
      // Predicated region
      $region17: #{nn_forward.1} parent=11 // pred_check
        %p143 = pneg %p78
      $region18: #{nn_forward.1} parent=11 // pred_check_branch
        %145 = sbr.rel (%p143) target = $region20
      $region19: #{nn_forward.1} parent=11 // pred_region
        _
      $region20: #{nn_forward.1} parent=11 // pred_fallthru
        _
      // Predicated region
      $region21: #{nn_forward.1} parent=11 // pred_check
        %p146 = pneg %p99
      $region22: #{nn_forward.1} parent=11 // pred_check_branch
        %148 = sbr.rel (%p146) target = $region24
      $region23: #{nn_forward.1} parent=11 // pred_region
        _
      $region24: #{nn_forward.1} parent=11 // pred_fallthru
        _
    $region12: #{nn_forward.1} parent=5 // pred_fallthru
      _
    %p149 = scmp.lt.s32.totalorder %s10, 2
    // Predicated region
    $region25: #{nn_forward.1} parent=5 // pred_check
      %p150 = pneg %p149
    $region26: #{nn_forward.1} parent=5 // pred_check_branch
      %152 = sbr.rel (%p150) target = $region28
    $region27: #{nn_forward.1} parent=5 // pred_region
      // Predicated region
      $region29: #{nn_forward.1} parent=27 // pred_check
        %p153 = pneg %p30
      $region30: #{nn_forward.1} parent=27 // pred_check_branch
        %155 = sbr.rel (%p153) target = $region32
      $region31: #{nn_forward.1} parent=27 // pred_region
        %s156 = smul.u32 32, %s10
        %p157 = scmp.lt.s32.totalorder %s156, 63
        %s158 = scalar_select %p157, %s156, 63
        %s159 = smul.addr %s158, 8
        %s160 = scalar_lea.vmem %s0, %s159
        %s161 = smul.u32 32, %s10
      $region32: #{nn_forward.1} parent=27 // pred_fallthru
        _
    $region28: #{nn_forward.1} parent=5 // pred_fallthru
      _
    %p162 = scmp.le.s32.totalorder 1, %s10
    %p163 = scmp.lt.s32.totalorder %s10, 3
    %p164 = pnand %p162, %p163
    %p165 = pneg %p164
    // Predicated region
    $region33: #{nn_forward.1} parent=5 // pred_check
      _
    $region34: #{nn_forward.1} parent=5 // pred_check_branch
      %167 = sbr.rel (%p164) target = $region36
    $region35: #{nn_forward.1} parent=5 // pred_region
      %s168 = ssub.s32 %s10, 1
      %s169 = smul.u32 32, %s15
      %p170 = scmp.lt.s32.totalorder %s169, 63
      %s171 = scalar_select %p170, %s169, 63
      %s172 = smul.addr %s171, 8
      %s173 = scalar_lea.vmem %s0, %s172
      %p174 = pneg %p36
      %p175 = pneg %p33
      %p176 = pneg %p57
      %p177 = pneg %p54
      %p178 = pneg %p78
      %p179 = pneg %p75
      %p180 = pneg %p99
      %p181 = pneg %p96
      %p182 = pneg %p125
      %p183 = pneg %p122
      %s184 = smul.u32 32, %s15
      %p185 = scmp.lt.s32.totalorder %s184, 63
      %s186 = scalar_select %p185, %s184, 63
      %s187 = smul.addr %s186, 8
      %s188 = scalar_lea.vmem %s4, %s187
      %s189 = smul.u32 32, %s15
      %p190 = scmp.lt.s32.totalorder %s189, 63
      %s191 = scalar_select %p190, %s189, 63
      %s192 = smul.addr %s191, 8
      %s193 = scalar_lea.vmem %s0, %s192
      %s194 = smul.u32 32, %s15
      %s195 = smul.u32 32, %s15
      %p196 = scmp.lt.s32.totalorder %s195, 63
      %s197 = scalar_select %p196, %s195, 63
      %s198 = smul.addr %s197, 8
      %s199 = scalar_lea.vmem %s4, %s198
      %s200 = smul.u32 32, %s15
      %v202 = vld [vmem:[%s193] sm:$0xff]
      %v203 = vld [vmem:[%s193 + $0x8] sm:$0xff]
      %v204 = vld [vmem:[%s193 + $0x10] sm:$0xff]
      %v205 = vld [vmem:[%s193 + $0x18] sm:$0xff]
      %v206 = vld [vmem:[%s193 + $0x20] sm:$0xff]
      %v207 = vld [vmem:[%s193 + $0x28] sm:$0xff]
      %v208 = vld [vmem:[%s193 + $0x30] sm:$0xff]
      %v209 = vld [vmem:[%s193 + $0x38] sm:$0xff]
      %v210 = vld [vmem:[%s193 + $0x40] sm:$0xff]
      %v211 = vld [vmem:[%s193 + $0x48] sm:$0xff]
      %v212 = vld [vmem:[%s193 + $0x50] sm:$0xff]
      %v213 = vld [vmem:[%s193 + $0x58] sm:$0xff]
      %v214 = vld [vmem:[%s193 + $0x60] sm:$0xff]
      %v215 = vld [vmem:[%s193 + $0x68] sm:$0xff]
      %v216 = vld [vmem:[%s193 + $0x70] sm:$0xff]
      %v217 = vld [vmem:[%s193 + $0x78] sm:$0xff]
      %v218 = vld [vmem:[%s193 + $0x80] sm:$0xff]
      %v219 = vld [vmem:[%s193 + $0x88] sm:$0xff]
      %v220 = vld [vmem:[%s193 + $0x90] sm:$0xff]
      %v221 = vld [vmem:[%s193 + $0x98] sm:$0xff]
      %v222 = vld [vmem:[%s193 + $0xa0] sm:$0xff]
      %v223 = vld [vmem:[%s193 + $0xa8] sm:$0xff]
      %v224 = vld [vmem:[%s193 + $0xb0] sm:$0xff]
      %v225 = vld [vmem:[%s193 + $0xb8] sm:$0xff]
      %v226 = vld [vmem:[%s193 + $0xc0] sm:$0xff]
      %v227 = vld [vmem:[%s193 + $0xc8] sm:$0xff]
      %v228 = vld [vmem:[%s193 + $0xd0] sm:$0xff]
      %v229 = vld [vmem:[%s193 + $0xd8] sm:$0xff]
      %v230 = vld [vmem:[%s193 + $0xe0] sm:$0xff]
      %v231 = vld [vmem:[%s193 + $0xe8] sm:$0xff]
      %v232 = vld [vmem:[%s193 + $0xf0] sm:$0xff]
      %v233 = vld [vmem:[%s193 + $0xf8] sm:$0xff]
      %v234 = vpack.c.bf16 %v203, %v202
      %v235 = vpack.c.bf16 %v205, %v204
      %v236 = vpack.c.bf16 %v207, %v206
      %v237 = vpack.c.bf16 %v209, %v208
      %v238 = vpack.c.bf16 %v211, %v210
      %v239 = vpack.c.bf16 %v213, %v212
      %v240 = vpack.c.bf16 %v215, %v214
      %v241 = vpack.c.bf16 %v217, %v216
      %v242 = vpack.c.bf16 %v219, %v218
      %v243 = vpack.c.bf16 %v221, %v220
      %v244 = vpack.c.bf16 %v223, %v222
      %v245 = vpack.c.bf16 %v225, %v224
      %v246 = vpack.c.bf16 %v227, %v226
      %v247 = vpack.c.bf16 %v229, %v228
      %v248 = vpack.c.bf16 %v231, %v230
      %v249 = vpack.c.bf16 %v233, %v232
      %v250 = vld [vmem:[%s1] sm:$0xf]
      %v251 = vld [vmem:[%s1 + $0x4] sm:$0xf]
      %v252 = vld [vmem:[%s3] sm:$0x1]
      %v253 = vlaneseq
      %v254 = vshrl.u32 %v253, 7
      %v255 = vsub.s32 0, %v254
      %v256 = vrot.slane %v252, %v255
      %v259 = vunpack.c.l.b16 %v250
      %v260 = vunpack.c.l.b16 %v251
      %v261 = vpack.c.b16 %v260, %v259
      %vm263 = vcmask 130048
      %v265 = vsel %vm263, %v234, 0
      %v268 = vsel %vm263, %v235, 0
      %v271 = vsel %vm263, %v236, 0
      %v274 = vsel %vm263, %v237, 0
      %v277 = vsel %vm263, %v238, 0
      %v280 = vsel %vm263, %v239, 0
      %v283 = vsel %vm263, %v240, 0
      %v286 = vsel %vm263, %v241, 0
      %v289 = vsel %vm263, %v242, 0
      %v292 = vsel %vm263, %v243, 0
      %v295 = vsel %vm263, %v244, 0
      %v298 = vsel %vm263, %v245, 0
      %v301 = vsel %vm263, %v246, 0
      %v304 = vsel %vm263, %v247, 0
      %v307 = vsel %vm263, %v248, 0
      %v310 = vsel %vm263, %v249, 0
      %312 = vmatprep.subr.bf16.mxu0 0
      %313 = vmatpush1.bf16.msra.mxu0 0
      %314 = vmatprep.subr.bf16.mxu0 0
      %315 = vmatpush1.bf16.msra.mxu0 0
      %316 = vmatprep.subr.bf16.mxu0 0
      %317 = vmatpush1.bf16.msra.mxu0 0
      %318 = vmatprep.subr.bf16.mxu0 0
      %319 = vmatpush1.bf16.msra.mxu0 0
      %320 = vmatprep.subr.bf16.mxu0 0
      %321 = vmatpush1.bf16.msra.mxu0 0
      %322 = vmatprep.subr.bf16.mxu0 0
      %323 = vmatpush1.bf16.msra.mxu0 0
      %324 = vmatprep.subr.bf16.mxu0 0
      %325 = vmatpush1.bf16.msra.mxu0 0
      %326 = vmatprep.subr.bf16.mxu0 0
      %327 = vmatpush1.bf16.msra.mxu0 %v261
      %328 = vmatprep.subr.bf16.mxu0 0
      %329 = vmatpush2.bf16.msra.mxu0 0
      %330 = vmatprep.subr.bf16.mxu0 0
      %331 = vmatpush2.bf16.msra.mxu0 0
      %332 = vmatprep.subr.bf16.mxu0 0
      %333 = vmatpush2.bf16.msra.mxu0 0
      %334 = vmatprep.subr.bf16.mxu0 0
      %335 = vmatpush2.bf16.msra.mxu0 0
      %336 = vmatprep.subr.bf16.mxu0 0
      %337 = vmatpush2.bf16.msra.mxu0 0
      %338 = vmatprep.subr.bf16.mxu0 0
      %339 = vmatpush2.bf16.msra.mxu0 0
      %340 = vmatprep.subr.bf16.mxu0 0
      %341 = vmatpush2.bf16.msra.mxu0 0
      %342 = vmatprep.subr.bf16.mxu0 0
      %343 = vmatpush2.bf16.msra.mxu0 0
      %344 = vmatprep.mubr.bf16.mxu0 0
      %345 = vmatmul.mubr.bf16.gmra.mxu0 %v265
      %v346 = vpop.f32.mrf.mxu0
      %v347 = vadd.f32 %v256, %v346
      %v348 = vpop.f32.mrf.mxu0
      %v349 = vpop.f32.mrf.mxu0
      %v350 = vadd.f32 %v256, %v349
      %v351 = vpop.f32.mrf.mxu0
      %352 = vmatprep.mubr.bf16.mxu0 0
      %353 = vmatmul.mubr.bf16.gmra.mxu0 %v268
      %v354 = vpop.f32.mrf.mxu0
      %v355 = vadd.f32 %v256, %v354
      %v356 = vpop.f32.mrf.mxu0
      %v357 = vpop.f32.mrf.mxu0
      %v358 = vadd.f32 %v256, %v357
      %v359 = vpop.f32.mrf.mxu0
      %360 = vmatprep.mubr.bf16.mxu0 0
      %361 = vmatmul.mubr.bf16.gmra.mxu0 %v271
      %v362 = vpop.f32.mrf.mxu0
      %v363 = vadd.f32 %v256, %v362
      %v364 = vpop.f32.mrf.mxu0
      %v365 = vpop.f32.mrf.mxu0
      %v366 = vadd.f32 %v256, %v365
      %v367 = vpop.f32.mrf.mxu0
      %368 = vmatprep.mubr.bf16.mxu0 0
      %369 = vmatmul.mubr.bf16.gmra.mxu0 %v274
      %v370 = vpop.f32.mrf.mxu0
      %v371 = vadd.f32 %v256, %v370
      %v372 = vpop.f32.mrf.mxu0
      %v373 = vpop.f32.mrf.mxu0
      %v374 = vadd.f32 %v256, %v373
      %v375 = vpop.f32.mrf.mxu0
      %376 = vmatprep.mubr.bf16.mxu0 0
      %377 = vmatmul.mubr.bf16.gmra.mxu0 %v277
      %v378 = vpop.f32.mrf.mxu0
      %v379 = vadd.f32 %v256, %v378
      %v380 = vpop.f32.mrf.mxu0
      %v381 = vpop.f32.mrf.mxu0
      %v382 = vadd.f32 %v256, %v381
      %v383 = vpop.f32.mrf.mxu0
      %384 = vmatprep.mubr.bf16.mxu0 0
      %385 = vmatmul.mubr.bf16.gmra.mxu0 %v280
      %v386 = vpop.f32.mrf.mxu0
      %v387 = vadd.f32 %v256, %v386
      %v388 = vpop.f32.mrf.mxu0
      %v389 = vpop.f32.mrf.mxu0
      %v390 = vadd.f32 %v256, %v389
      %v391 = vpop.f32.mrf.mxu0
      %392 = vmatprep.mubr.bf16.mxu0 0
      %393 = vmatmul.mubr.bf16.gmra.mxu0 %v283
      %v394 = vpop.f32.mrf.mxu0
      %v395 = vadd.f32 %v256, %v394
      %v396 = vpop.f32.mrf.mxu0
      %v397 = vpop.f32.mrf.mxu0
      %v398 = vadd.f32 %v256, %v397
      %v399 = vpop.f32.mrf.mxu0
      %400 = vmatprep.mubr.bf16.mxu0 0
      %401 = vmatmul.mubr.bf16.gmra.mxu0 %v286
      %v402 = vpop.f32.mrf.mxu0
      %v403 = vadd.f32 %v256, %v402
      %v404 = vpop.f32.mrf.mxu0
      %v405 = vpop.f32.mrf.mxu0
      %v406 = vadd.f32 %v256, %v405
      %v407 = vpop.f32.mrf.mxu0
      %408 = vmatprep.mubr.bf16.mxu0 0
      %409 = vmatmul.mubr.bf16.gmra.mxu0 %v289
      %v410 = vpop.f32.mrf.mxu0
      %v411 = vadd.f32 %v256, %v410
      %v412 = vpop.f32.mrf.mxu0
      %v413 = vpop.f32.mrf.mxu0
      %v414 = vadd.f32 %v256, %v413
      %v415 = vpop.f32.mrf.mxu0
      %416 = vmatprep.mubr.bf16.mxu0 0
      %417 = vmatmul.mubr.bf16.gmra.mxu0 %v292
      %v418 = vpop.f32.mrf.mxu0
      %v419 = vadd.f32 %v256, %v418
      %v420 = vpop.f32.mrf.mxu0
      %v421 = vpop.f32.mrf.mxu0
      %v422 = vadd.f32 %v256, %v421
      %v423 = vpop.f32.mrf.mxu0
      %424 = vmatprep.mubr.bf16.mxu0 0
      %425 = vmatmul.mubr.bf16.gmra.mxu0 %v295
      %v426 = vpop.f32.mrf.mxu0
      %v427 = vadd.f32 %v256, %v426
      %v428 = vpop.f32.mrf.mxu0
      %v429 = vpop.f32.mrf.mxu0
      %v430 = vadd.f32 %v256, %v429
      %v431 = vpop.f32.mrf.mxu0
      %432 = vmatprep.mubr.bf16.mxu0 0
      %433 = vmatmul.mubr.bf16.gmra.mxu0 %v298
      %v434 = vpop.f32.mrf.mxu0
      %v435 = vadd.f32 %v256, %v434
      %v436 = vpop.f32.mrf.mxu0
      %v437 = vpop.f32.mrf.mxu0
      %v438 = vadd.f32 %v256, %v437
      %v439 = vpop.f32.mrf.mxu0
      %440 = vmatprep.mubr.bf16.mxu0 0
      %441 = vmatmul.mubr.bf16.gmra.mxu0 %v301
      %v442 = vpop.f32.mrf.mxu0
      %v443 = vadd.f32 %v256, %v442
      %v444 = vpop.f32.mrf.mxu0
      %v445 = vpop.f32.mrf.mxu0
      %v446 = vadd.f32 %v256, %v445
      %v447 = vpop.f32.mrf.mxu0
      %448 = vmatprep.mubr.bf16.mxu0 0
      %449 = vmatmul.mubr.bf16.gmra.mxu0 %v304
      %v450 = vpop.f32.mrf.mxu0
      %v451 = vadd.f32 %v256, %v450
      %v452 = vpop.f32.mrf.mxu0
      %v453 = vpop.f32.mrf.mxu0
      %v454 = vadd.f32 %v256, %v453
      %v455 = vpop.f32.mrf.mxu0
      %456 = vmatprep.mubr.bf16.mxu0 0
      %457 = vmatmul.mubr.bf16.gmra.mxu0 %v307
      %v458 = vpop.f32.mrf.mxu0
      %v459 = vadd.f32 %v256, %v458
      %v460 = vpop.f32.mrf.mxu0
      %v461 = vpop.f32.mrf.mxu0
      %v462 = vadd.f32 %v256, %v461
      %v463 = vpop.f32.mrf.mxu0
      %464 = vmatprep.mubr.bf16.mxu0 0
      %465 = vmatmul.mubr.bf16.gmra.mxu0 %v310
      %v466 = vpop.f32.mrf.mxu0
      %v467 = vadd.f32 %v256, %v466
      %v468 = vpop.f32.mrf.mxu0
      %v469 = vpop.f32.mrf.mxu0
      %v470 = vadd.f32 %v256, %v469
      %v471 = vpop.f32.mrf.mxu0
      %472 = vdwg.mxu0
      %v473 = vmax.f32 %v347, 0.0
      %v474 = vmax.f32 %v350, 0.0
      %v475 = vmax.f32 %v355, 0.0
      %v476 = vmax.f32 %v358, 0.0
      %v477 = vmax.f32 %v363, 0.0
      %v478 = vmax.f32 %v366, 0.0
      %v479 = vmax.f32 %v371, 0.0
      %v480 = vmax.f32 %v374, 0.0
      %v481 = vmax.f32 %v379, 0.0
      %v482 = vmax.f32 %v382, 0.0
      %v483 = vmax.f32 %v387, 0.0
      %v484 = vmax.f32 %v390, 0.0
      %v485 = vmax.f32 %v395, 0.0
      %v486 = vmax.f32 %v398, 0.0
      %v487 = vmax.f32 %v403, 0.0
      %v488 = vmax.f32 %v406, 0.0
      %v489 = vmax.f32 %v411, 0.0
      %v490 = vmax.f32 %v414, 0.0
      %v491 = vmax.f32 %v419, 0.0
      %v492 = vmax.f32 %v422, 0.0
      %v493 = vmax.f32 %v427, 0.0
      %v494 = vmax.f32 %v430, 0.0
      %v495 = vmax.f32 %v435, 0.0
      %v496 = vmax.f32 %v438, 0.0
      %v497 = vmax.f32 %v443, 0.0
      %v498 = vmax.f32 %v446, 0.0
      %v499 = vmax.f32 %v451, 0.0
      %v500 = vmax.f32 %v454, 0.0
      %v501 = vmax.f32 %v459, 0.0
      %v502 = vmax.f32 %v462, 0.0
      %v503 = vmax.f32 %v467, 0.0
      %v504 = vmax.f32 %v470, 0.0
      %v505 = vpack.c.bf16 %v474, %v473
      %v506 = vpack.c.bf16 %v476, %v475
      %v507 = vpack.c.bf16 %v478, %v477
      %v508 = vpack.c.bf16 %v480, %v479
      %v509 = vpack.c.bf16 %v482, %v481
      %v510 = vpack.c.bf16 %v484, %v483
      %v511 = vpack.c.bf16 %v486, %v485
      %v512 = vpack.c.bf16 %v488, %v487
      %v513 = vpack.c.bf16 %v490, %v489
      %v514 = vpack.c.bf16 %v492, %v491
      %v515 = vpack.c.bf16 %v494, %v493
      %v516 = vpack.c.bf16 %v496, %v495
      %v517 = vpack.c.bf16 %v498, %v497
      %v518 = vpack.c.bf16 %v500, %v499
      %v519 = vpack.c.bf16 %v502, %v501
      %v520 = vpack.c.bf16 %v504, %v503
      %v521 = vld [vmem:[%s2] sm:$0xf]
      %v522 = vld [vmem:[%s2 + $0x4] sm:$0xf]
      %v523 = vld [vmem:[%s2 + $0x8] sm:$0xf]
      %v524 = vld [vmem:[%s2 + $0xc] sm:$0xf]
      %v525 = vld [vmem:[%s2 + $0x10] sm:$0xf]
      %v526 = vld [vmem:[%s2 + $0x14] sm:$0xf]
      %v527 = vld [vmem:[%s2 + $0x18] sm:$0xf]
      %v528 = vld [vmem:[%s2 + $0x1c] sm:$0xf]
      %v529 = vld [vmem:[%s2 + $0x20] sm:$0xf]
      %v530 = vld [vmem:[%s2 + $0x24] sm:$0xf]
      %v531 = vld [vmem:[%s2 + $0x28] sm:$0xf]
      %v532 = vld [vmem:[%s2 + $0x2c] sm:$0xf]
      %v533 = vld [vmem:[%s2 + $0x30] sm:$0xf]
      %v534 = vld [vmem:[%s2 + $0x34] sm:$0xf]
      %v535 = vld [vmem:[%s2 + $0x38] sm:$0xf]
      %v536 = vld [vmem:[%s2 + $0x3c] sm:$0xf]
      %v537 = vld [vmem:[%s3 + $0x1] sm:$0x1]
      %v538 = vlaneseq
      %v539 = vshrl.u32 %v538, 7
      %v540 = vsub.s32 0, %v539
      %v541 = vrot.slane %v537, %v540
      %v558 = vunpack.c.l.b16 %v521
      %v559 = vunpack.c.l.b16 %v522
      %v560 = vunpack.c.l.b16 %v523
      %v561 = vunpack.c.l.b16 %v524
      %v562 = vunpack.c.l.b16 %v525
      %v563 = vunpack.c.l.b16 %v526
      %v564 = vunpack.c.l.b16 %v527
      %v565 = vunpack.c.l.b16 %v528
      %v566 = vunpack.c.l.b16 %v529
      %v567 = vunpack.c.l.b16 %v530
      %v568 = vunpack.c.l.b16 %v531
      %v569 = vunpack.c.l.b16 %v532
      %v570 = vunpack.c.l.b16 %v533
      %v571 = vunpack.c.l.b16 %v534
      %v572 = vunpack.c.l.b16 %v535
      %v573 = vunpack.c.l.b16 %v536
      %v574 = vpack.c.b16 %v559, %v558
      %v575 = vpack.c.b16 %v561, %v560
      %v576 = vpack.c.b16 %v563, %v562
      %v577 = vpack.c.b16 %v565, %v564
      %v578 = vpack.c.b16 %v567, %v566
      %v579 = vpack.c.b16 %v569, %v568
      %v580 = vpack.c.b16 %v571, %v570
      %v581 = vpack.c.b16 %v573, %v572
      %590 = vmatprep.subr.bf16.mxu0 0
      %591 = vmatpush1.bf16.msra.mxu0 %v581
      %592 = vmatprep.subr.bf16.mxu0 0
      %593 = vmatpush1.bf16.msra.mxu0 %v580
      %594 = vmatprep.subr.bf16.mxu0 0
      %595 = vmatpush1.bf16.msra.mxu0 %v579
      %596 = vmatprep.subr.bf16.mxu0 0
      %597 = vmatpush1.bf16.msra.mxu0 %v578
      %598 = vmatprep.subr.bf16.mxu0 0
      %599 = vmatpush1.bf16.msra.mxu0 %v577
      %600 = vmatprep.subr.bf16.mxu0 0
      %601 = vmatpush1.bf16.msra.mxu0 %v576
      %602 = vmatprep.subr.bf16.mxu0 0
      %603 = vmatpush1.bf16.msra.mxu0 %v575
      %604 = vmatprep.subr.bf16.mxu0 0
      %605 = vmatpush1.bf16.msra.mxu0 %v574
      %606 = vmatprep.subr.bf16.mxu0 0
      %607 = vmatpush2.bf16.msra.mxu0 0
      %608 = vmatprep.subr.bf16.mxu0 0
      %609 = vmatpush2.bf16.msra.mxu0 0
      %610 = vmatprep.subr.bf16.mxu0 0
      %611 = vmatpush2.bf16.msra.mxu0 0
      %612 = vmatprep.subr.bf16.mxu0 0
      %613 = vmatpush2.bf16.msra.mxu0 0
      %614 = vmatprep.subr.bf16.mxu0 0
      %615 = vmatpush2.bf16.msra.mxu0 0
      %616 = vmatprep.subr.bf16.mxu0 0
      %617 = vmatpush2.bf16.msra.mxu0 0
      %618 = vmatprep.subr.bf16.mxu0 0
      %619 = vmatpush2.bf16.msra.mxu0 0
      %620 = vmatprep.subr.bf16.mxu0 0
      %621 = vmatpush2.bf16.msra.mxu0 0
      %622 = vmatprep.mubr.bf16.mxu0 0
      %623 = vmatmul.mubr.bf16.gmra.mxu0 %v505
      %v624 = vpop.f32.mrf.mxu0
      %v625 = vadd.f32 %v541, %v624
      %v626 = vpop.f32.mrf.mxu0
      %v627 = vpop.f32.mrf.mxu0
      %v628 = vadd.f32 %v541, %v627
      %v629 = vpop.f32.mrf.mxu0
      %630 = vmatprep.mubr.bf16.mxu0 0
      %631 = vmatmul.mubr.bf16.gmra.mxu0 %v506
      %v632 = vpop.f32.mrf.mxu0
      %v633 = vadd.f32 %v541, %v632
      %v634 = vpop.f32.mrf.mxu0
      %v635 = vpop.f32.mrf.mxu0
      %v636 = vadd.f32 %v541, %v635
      %v637 = vpop.f32.mrf.mxu0
      %638 = vmatprep.mubr.bf16.mxu0 0
      %639 = vmatmul.mubr.bf16.gmra.mxu0 %v507
      %v640 = vpop.f32.mrf.mxu0
      %v641 = vadd.f32 %v541, %v640
      %v642 = vpop.f32.mrf.mxu0
      %v643 = vpop.f32.mrf.mxu0
      %v644 = vadd.f32 %v541, %v643
      %v645 = vpop.f32.mrf.mxu0
      %646 = vmatprep.mubr.bf16.mxu0 0
      %647 = vmatmul.mubr.bf16.gmra.mxu0 %v508
      %v648 = vpop.f32.mrf.mxu0
      %v649 = vadd.f32 %v541, %v648
      %v650 = vpop.f32.mrf.mxu0
      %v651 = vpop.f32.mrf.mxu0
      %v652 = vadd.f32 %v541, %v651
      %v653 = vpop.f32.mrf.mxu0
      %654 = vmatprep.mubr.bf16.mxu0 0
      %655 = vmatmul.mubr.bf16.gmra.mxu0 %v509
      %v656 = vpop.f32.mrf.mxu0
      %v657 = vadd.f32 %v541, %v656
      %v658 = vpop.f32.mrf.mxu0
      %v659 = vpop.f32.mrf.mxu0
      %v660 = vadd.f32 %v541, %v659
      %v661 = vpop.f32.mrf.mxu0
      %662 = vmatprep.mubr.bf16.mxu0 0
      %663 = vmatmul.mubr.bf16.gmra.mxu0 %v510
      %v664 = vpop.f32.mrf.mxu0
      %v665 = vadd.f32 %v541, %v664
      %v666 = vpop.f32.mrf.mxu0
      %v667 = vpop.f32.mrf.mxu0
      %v668 = vadd.f32 %v541, %v667
      %v669 = vpop.f32.mrf.mxu0
      %670 = vmatprep.mubr.bf16.mxu0 0
      %671 = vmatmul.mubr.bf16.gmra.mxu0 %v511
      %v672 = vpop.f32.mrf.mxu0
      %v673 = vadd.f32 %v541, %v672
      %v674 = vpop.f32.mrf.mxu0
      %v675 = vpop.f32.mrf.mxu0
      %v676 = vadd.f32 %v541, %v675
      %v677 = vpop.f32.mrf.mxu0
      %678 = vmatprep.mubr.bf16.mxu0 0
      %679 = vmatmul.mubr.bf16.gmra.mxu0 %v512
      %v680 = vpop.f32.mrf.mxu0
      %v681 = vadd.f32 %v541, %v680
      %v682 = vpop.f32.mrf.mxu0
      %v683 = vpop.f32.mrf.mxu0
      %v684 = vadd.f32 %v541, %v683
      %v685 = vpop.f32.mrf.mxu0
      %686 = vmatprep.mubr.bf16.mxu0 0
      %687 = vmatmul.mubr.bf16.gmra.mxu0 %v513
      %v688 = vpop.f32.mrf.mxu0
      %v689 = vadd.f32 %v541, %v688
      %v690 = vpop.f32.mrf.mxu0
      %v691 = vpop.f32.mrf.mxu0
      %v692 = vadd.f32 %v541, %v691
      %v693 = vpop.f32.mrf.mxu0
      %694 = vmatprep.mubr.bf16.mxu0 0
      %695 = vmatmul.mubr.bf16.gmra.mxu0 %v514
      %v696 = vpop.f32.mrf.mxu0
      %v697 = vadd.f32 %v541, %v696
      %v698 = vpop.f32.mrf.mxu0
      %v699 = vpop.f32.mrf.mxu0
      %v700 = vadd.f32 %v541, %v699
      %v701 = vpop.f32.mrf.mxu0
      %702 = vmatprep.mubr.bf16.mxu0 0
      %703 = vmatmul.mubr.bf16.gmra.mxu0 %v515
      %v704 = vpop.f32.mrf.mxu0
      %v705 = vadd.f32 %v541, %v704
      %v706 = vpop.f32.mrf.mxu0
      %v707 = vpop.f32.mrf.mxu0
      %v708 = vadd.f32 %v541, %v707
      %v709 = vpop.f32.mrf.mxu0
      %710 = vmatprep.mubr.bf16.mxu0 0
      %711 = vmatmul.mubr.bf16.gmra.mxu0 %v516
      %v712 = vpop.f32.mrf.mxu0
      %v713 = vadd.f32 %v541, %v712
      %v714 = vpop.f32.mrf.mxu0
      %v715 = vpop.f32.mrf.mxu0
      %v716 = vadd.f32 %v541, %v715
      %v717 = vpop.f32.mrf.mxu0
      %718 = vmatprep.mubr.bf16.mxu0 0
      %719 = vmatmul.mubr.bf16.gmra.mxu0 %v517
      %v720 = vpop.f32.mrf.mxu0
      %v721 = vadd.f32 %v541, %v720
      %v722 = vpop.f32.mrf.mxu0
      %v723 = vpop.f32.mrf.mxu0
      %v724 = vadd.f32 %v541, %v723
      %v725 = vpop.f32.mrf.mxu0
      %726 = vmatprep.mubr.bf16.mxu0 0
      %727 = vmatmul.mubr.bf16.gmra.mxu0 %v518
      %v728 = vpop.f32.mrf.mxu0
      %v729 = vadd.f32 %v541, %v728
      %v730 = vpop.f32.mrf.mxu0
      %v731 = vpop.f32.mrf.mxu0
      %v732 = vadd.f32 %v541, %v731
      %v733 = vpop.f32.mrf.mxu0
      %734 = vmatprep.mubr.bf16.mxu0 0
      %735 = vmatmul.mubr.bf16.gmra.mxu0 %v519
      %v736 = vpop.f32.mrf.mxu0
      %v737 = vadd.f32 %v541, %v736
      %v738 = vpop.f32.mrf.mxu0
      %v739 = vpop.f32.mrf.mxu0
      %v740 = vadd.f32 %v541, %v739
      %v741 = vpop.f32.mrf.mxu0
      %742 = vmatprep.mubr.bf16.mxu0 0
      %743 = vmatmul.mubr.bf16.gmra.mxu0 %v520
      %v744 = vpop.f32.mrf.mxu0
      %v745 = vadd.f32 %v541, %v744
      %v746 = vpop.f32.mrf.mxu0
      %v747 = vpop.f32.mrf.mxu0
      %v748 = vadd.f32 %v541, %v747
      %v749 = vpop.f32.mrf.mxu0
      %750 = vdwg.mxu0
      %v751 = vmax.f32 %v625, 0.0
      %v752 = vmax.f32 %v628, 0.0
      %v753 = vmax.f32 %v633, 0.0
      %v754 = vmax.f32 %v636, 0.0
      %v755 = vmax.f32 %v641, 0.0
      %v756 = vmax.f32 %v644, 0.0
      %v757 = vmax.f32 %v649, 0.0
      %v758 = vmax.f32 %v652, 0.0
      %v759 = vmax.f32 %v657, 0.0
      %v760 = vmax.f32 %v660, 0.0
      %v761 = vmax.f32 %v665, 0.0
      %v762 = vmax.f32 %v668, 0.0
      %v763 = vmax.f32 %v673, 0.0
      %v764 = vmax.f32 %v676, 0.0
      %v765 = vmax.f32 %v681, 0.0
      %v766 = vmax.f32 %v684, 0.0
      %v767 = vmax.f32 %v689, 0.0
      %v768 = vmax.f32 %v692, 0.0
      %v769 = vmax.f32 %v697, 0.0
      %v770 = vmax.f32 %v700, 0.0
      %v771 = vmax.f32 %v705, 0.0
      %v772 = vmax.f32 %v708, 0.0
      %v773 = vmax.f32 %v713, 0.0
      %v774 = vmax.f32 %v716, 0.0
      %v775 = vmax.f32 %v721, 0.0
      %v776 = vmax.f32 %v724, 0.0
      %v777 = vmax.f32 %v729, 0.0
      %v778 = vmax.f32 %v732, 0.0
      %v779 = vmax.f32 %v737, 0.0
      %v780 = vmax.f32 %v740, 0.0
      %v781 = vmax.f32 %v745, 0.0
      %v782 = vmax.f32 %v748, 0.0
      %v783 = vpack.c.bf16 %v752, %v751
      %v784 = vpack.c.bf16 %v754, %v753
      %v785 = vpack.c.bf16 %v756, %v755
      %v786 = vpack.c.bf16 %v758, %v757
      %v787 = vpack.c.bf16 %v760, %v759
      %v788 = vpack.c.bf16 %v762, %v761
      %v789 = vpack.c.bf16 %v764, %v763
      %v790 = vpack.c.bf16 %v766, %v765
      %v791 = vpack.c.bf16 %v768, %v767
      %v792 = vpack.c.bf16 %v770, %v769
      %v793 = vpack.c.bf16 %v772, %v771
      %v794 = vpack.c.bf16 %v774, %v773
      %v795 = vpack.c.bf16 %v776, %v775
      %v796 = vpack.c.bf16 %v778, %v777
      %v797 = vpack.c.bf16 %v780, %v779
      %v798 = vpack.c.bf16 %v782, %v781
      %s799 = scalar_lea.vmem %s2, 64
      %v800 = vld [vmem:[%s799] sm:$0xf]
      %v801 = vld [vmem:[%s799 + $0x4] sm:$0xf]
      %v802 = vld [vmem:[%s799 + $0x8] sm:$0xf]
      %v803 = vld [vmem:[%s799 + $0xc] sm:$0xf]
      %v804 = vld [vmem:[%s799 + $0x10] sm:$0xf]
      %v805 = vld [vmem:[%s799 + $0x14] sm:$0xf]
      %v806 = vld [vmem:[%s799 + $0x18] sm:$0xf]
      %v807 = vld [vmem:[%s799 + $0x1c] sm:$0xf]
      %v808 = vld [vmem:[%s799 + $0x20] sm:$0xf]
      %v809 = vld [vmem:[%s799 + $0x24] sm:$0xf]
      %v810 = vld [vmem:[%s799 + $0x28] sm:$0xf]
      %v811 = vld [vmem:[%s799 + $0x2c] sm:$0xf]
      %v812 = vld [vmem:[%s799 + $0x30] sm:$0xf]
      %v813 = vld [vmem:[%s799 + $0x34] sm:$0xf]
      %v814 = vld [vmem:[%s799 + $0x38] sm:$0xf]
      %v815 = vld [vmem:[%s799 + $0x3c] sm:$0xf]
      %v816 = vld [vmem:[%s3 + $0x2] sm:$0x1]
      %v817 = vlaneseq
      %v818 = vshrl.u32 %v817, 7
      %v819 = vsub.s32 0, %v818
      %v820 = vrot.slane %v816, %v819
      %v837 = vunpack.c.l.b16 %v800
      %v838 = vunpack.c.l.b16 %v801
      %v839 = vunpack.c.l.b16 %v802
      %v840 = vunpack.c.l.b16 %v803
      %v841 = vunpack.c.l.b16 %v804
      %v842 = vunpack.c.l.b16 %v805
      %v843 = vunpack.c.l.b16 %v806
      %v844 = vunpack.c.l.b16 %v807
      %v845 = vunpack.c.l.b16 %v808
      %v846 = vunpack.c.l.b16 %v809
      %v847 = vunpack.c.l.b16 %v810
      %v848 = vunpack.c.l.b16 %v811
      %v849 = vunpack.c.l.b16 %v812
      %v850 = vunpack.c.l.b16 %v813
      %v851 = vunpack.c.l.b16 %v814
      %v852 = vunpack.c.l.b16 %v815
      %v853 = vpack.c.b16 %v838, %v837
      %v854 = vpack.c.b16 %v840, %v839
      %v855 = vpack.c.b16 %v842, %v841
      %v856 = vpack.c.b16 %v844, %v843
      %v857 = vpack.c.b16 %v846, %v845
      %v858 = vpack.c.b16 %v848, %v847
      %v859 = vpack.c.b16 %v850, %v849
      %v860 = vpack.c.b16 %v852, %v851
      %869 = vmatprep.subr.bf16.mxu0 0
      %870 = vmatpush1.bf16.msra.mxu0 %v860
      %871 = vmatprep.subr.bf16.mxu0 0
      %872 = vmatpush1.bf16.msra.mxu0 %v859
      %873 = vmatprep.subr.bf16.mxu0 0
      %874 = vmatpush1.bf16.msra.mxu0 %v858
      %875 = vmatprep.subr.bf16.mxu0 0
      %876 = vmatpush1.bf16.msra.mxu0 %v857
      %877 = vmatprep.subr.bf16.mxu0 0
      %878 = vmatpush1.bf16.msra.mxu0 %v856
      %879 = vmatprep.subr.bf16.mxu0 0
      %880 = vmatpush1.bf16.msra.mxu0 %v855
      %881 = vmatprep.subr.bf16.mxu0 0
      %882 = vmatpush1.bf16.msra.mxu0 %v854
      %883 = vmatprep.subr.bf16.mxu0 0
      %884 = vmatpush1.bf16.msra.mxu0 %v853
      %885 = vmatprep.subr.bf16.mxu0 0
      %886 = vmatpush2.bf16.msra.mxu0 0
      %887 = vmatprep.subr.bf16.mxu0 0
      %888 = vmatpush2.bf16.msra.mxu0 0
      %889 = vmatprep.subr.bf16.mxu0 0
      %890 = vmatpush2.bf16.msra.mxu0 0
      %891 = vmatprep.subr.bf16.mxu0 0
      %892 = vmatpush2.bf16.msra.mxu0 0
      %893 = vmatprep.subr.bf16.mxu0 0
      %894 = vmatpush2.bf16.msra.mxu0 0
      %895 = vmatprep.subr.bf16.mxu0 0
      %896 = vmatpush2.bf16.msra.mxu0 0
      %897 = vmatprep.subr.bf16.mxu0 0
      %898 = vmatpush2.bf16.msra.mxu0 0
      %899 = vmatprep.subr.bf16.mxu0 0
      %900 = vmatpush2.bf16.msra.mxu0 0
      %901 = vmatprep.mubr.bf16.mxu0 0
      %902 = vmatmul.mubr.bf16.gmra.mxu0 %v783
      %v903 = vpop.f32.mrf.mxu0
      %v904 = vadd.f32 %v820, %v903
      %v905 = vpop.f32.mrf.mxu0
      %v906 = vpop.f32.mrf.mxu0
      %v907 = vadd.f32 %v820, %v906
      %v908 = vpop.f32.mrf.mxu0
      %909 = vmatprep.mubr.bf16.mxu0 0
      %910 = vmatmul.mubr.bf16.gmra.mxu0 %v784
      %v911 = vpop.f32.mrf.mxu0
      %v912 = vadd.f32 %v820, %v911
      %v913 = vpop.f32.mrf.mxu0
      %v914 = vpop.f32.mrf.mxu0
      %v915 = vadd.f32 %v820, %v914
      %v916 = vpop.f32.mrf.mxu0
      %917 = vmatprep.mubr.bf16.mxu0 0
      %918 = vmatmul.mubr.bf16.gmra.mxu0 %v785
      %v919 = vpop.f32.mrf.mxu0
      %v920 = vadd.f32 %v820, %v919
      %v921 = vpop.f32.mrf.mxu0
      %v922 = vpop.f32.mrf.mxu0
      %v923 = vadd.f32 %v820, %v922
      %v924 = vpop.f32.mrf.mxu0
      %925 = vmatprep.mubr.bf16.mxu0 0
      %926 = vmatmul.mubr.bf16.gmra.mxu0 %v786
      %v927 = vpop.f32.mrf.mxu0
      %v928 = vadd.f32 %v820, %v927
      %v929 = vpop.f32.mrf.mxu0
      %v930 = vpop.f32.mrf.mxu0
      %v931 = vadd.f32 %v820, %v930
      %v932 = vpop.f32.mrf.mxu0
      %933 = vmatprep.mubr.bf16.mxu0 0
      %934 = vmatmul.mubr.bf16.gmra.mxu0 %v787
      %v935 = vpop.f32.mrf.mxu0
      %v936 = vadd.f32 %v820, %v935
      %v937 = vpop.f32.mrf.mxu0
      %v938 = vpop.f32.mrf.mxu0
      %v939 = vadd.f32 %v820, %v938
      %v940 = vpop.f32.mrf.mxu0
      %941 = vmatprep.mubr.bf16.mxu0 0
      %942 = vmatmul.mubr.bf16.gmra.mxu0 %v788
      %v943 = vpop.f32.mrf.mxu0
      %v944 = vadd.f32 %v820, %v943
      %v945 = vpop.f32.mrf.mxu0
      %v946 = vpop.f32.mrf.mxu0
      %v947 = vadd.f32 %v820, %v946
      %v948 = vpop.f32.mrf.mxu0
      %949 = vmatprep.mubr.bf16.mxu0 0
      %950 = vmatmul.mubr.bf16.gmra.mxu0 %v789
      %v951 = vpop.f32.mrf.mxu0
      %v952 = vadd.f32 %v820, %v951
      %v953 = vpop.f32.mrf.mxu0
      %v954 = vpop.f32.mrf.mxu0
      %v955 = vadd.f32 %v820, %v954
      %v956 = vpop.f32.mrf.mxu0
      %957 = vmatprep.mubr.bf16.mxu0 0
      %958 = vmatmul.mubr.bf16.gmra.mxu0 %v790
      %v959 = vpop.f32.mrf.mxu0
      %v960 = vadd.f32 %v820, %v959
      %v961 = vpop.f32.mrf.mxu0
      %v962 = vpop.f32.mrf.mxu0
      %v963 = vadd.f32 %v820, %v962
      %v964 = vpop.f32.mrf.mxu0
      %965 = vmatprep.mubr.bf16.mxu0 0
      %966 = vmatmul.mubr.bf16.gmra.mxu0 %v791
      %v967 = vpop.f32.mrf.mxu0
      %v968 = vadd.f32 %v820, %v967
      %v969 = vpop.f32.mrf.mxu0
      %v970 = vpop.f32.mrf.mxu0
      %v971 = vadd.f32 %v820, %v970
      %v972 = vpop.f32.mrf.mxu0
      %973 = vmatprep.mubr.bf16.mxu0 0
      %974 = vmatmul.mubr.bf16.gmra.mxu0 %v792
      %v975 = vpop.f32.mrf.mxu0
      %v976 = vadd.f32 %v820, %v975
      %v977 = vpop.f32.mrf.mxu0
      %v978 = vpop.f32.mrf.mxu0
      %v979 = vadd.f32 %v820, %v978
      %v980 = vpop.f32.mrf.mxu0
      %981 = vmatprep.mubr.bf16.mxu0 0
      %982 = vmatmul.mubr.bf16.gmra.mxu0 %v793
      %v983 = vpop.f32.mrf.mxu0
      %v984 = vadd.f32 %v820, %v983
      %v985 = vpop.f32.mrf.mxu0
      %v986 = vpop.f32.mrf.mxu0
      %v987 = vadd.f32 %v820, %v986
      %v988 = vpop.f32.mrf.mxu0
      %989 = vmatprep.mubr.bf16.mxu0 0
      %990 = vmatmul.mubr.bf16.gmra.mxu0 %v794
      %v991 = vpop.f32.mrf.mxu0
      %v992 = vadd.f32 %v820, %v991
      %v993 = vpop.f32.mrf.mxu0
      %v994 = vpop.f32.mrf.mxu0
      %v995 = vadd.f32 %v820, %v994
      %v996 = vpop.f32.mrf.mxu0
      %997 = vmatprep.mubr.bf16.mxu0 0
      %998 = vmatmul.mubr.bf16.gmra.mxu0 %v795
      %v999 = vpop.f32.mrf.mxu0
      %v1000 = vadd.f32 %v820, %v999
      %v1001 = vpop.f32.mrf.mxu0
      %v1002 = vpop.f32.mrf.mxu0
      %v1003 = vadd.f32 %v820, %v1002
      %v1004 = vpop.f32.mrf.mxu0
      %1005 = vmatprep.mubr.bf16.mxu0 0
      %1006 = vmatmul.mubr.bf16.gmra.mxu0 %v796
      %v1007 = vpop.f32.mrf.mxu0
      %v1008 = vadd.f32 %v820, %v1007
      %v1009 = vpop.f32.mrf.mxu0
      %v1010 = vpop.f32.mrf.mxu0
      %v1011 = vadd.f32 %v820, %v1010
      %v1012 = vpop.f32.mrf.mxu0
      %1013 = vmatprep.mubr.bf16.mxu0 0
      %1014 = vmatmul.mubr.bf16.gmra.mxu0 %v797
      %v1015 = vpop.f32.mrf.mxu0
      %v1016 = vadd.f32 %v820, %v1015
      %v1017 = vpop.f32.mrf.mxu0
      %v1018 = vpop.f32.mrf.mxu0
      %v1019 = vadd.f32 %v820, %v1018
      %v1020 = vpop.f32.mrf.mxu0
      %1021 = vmatprep.mubr.bf16.mxu0 0
      %1022 = vmatmul.mubr.bf16.gmra.mxu0 %v798
      %v1023 = vpop.f32.mrf.mxu0
      %v1024 = vadd.f32 %v820, %v1023
      %v1025 = vpop.f32.mrf.mxu0
      %v1026 = vpop.f32.mrf.mxu0
      %v1027 = vadd.f32 %v820, %v1026
      %v1028 = vpop.f32.mrf.mxu0
      %1029 = vdwg.mxu0
      %v1030 = vmax.f32 %v904, 0.0
      %v1031 = vmax.f32 %v907, 0.0
      %v1032 = vmax.f32 %v912, 0.0
      %v1033 = vmax.f32 %v915, 0.0
      %v1034 = vmax.f32 %v920, 0.0
      %v1035 = vmax.f32 %v923, 0.0
      %v1036 = vmax.f32 %v928, 0.0
      %v1037 = vmax.f32 %v931, 0.0
      %v1038 = vmax.f32 %v936, 0.0
      %v1039 = vmax.f32 %v939, 0.0
      %v1040 = vmax.f32 %v944, 0.0
      %v1041 = vmax.f32 %v947, 0.0
      %v1042 = vmax.f32 %v952, 0.0
      %v1043 = vmax.f32 %v955, 0.0
      %v1044 = vmax.f32 %v960, 0.0
      %v1045 = vmax.f32 %v963, 0.0
      %v1046 = vmax.f32 %v968, 0.0
      %v1047 = vmax.f32 %v971, 0.0
      %v1048 = vmax.f32 %v976, 0.0
      %v1049 = vmax.f32 %v979, 0.0
      %v1050 = vmax.f32 %v984, 0.0
      %v1051 = vmax.f32 %v987, 0.0
      %v1052 = vmax.f32 %v992, 0.0
      %v1053 = vmax.f32 %v995, 0.0
      %v1054 = vmax.f32 %v1000, 0.0
      %v1055 = vmax.f32 %v1003, 0.0
      %v1056 = vmax.f32 %v1008, 0.0
      %v1057 = vmax.f32 %v1011, 0.0
      %v1058 = vmax.f32 %v1016, 0.0
      %v1059 = vmax.f32 %v1019, 0.0
      %v1060 = vmax.f32 %v1024, 0.0
      %v1061 = vmax.f32 %v1027, 0.0
      %v1062 = vpack.c.bf16 %v1031, %v1030
      %v1063 = vpack.c.bf16 %v1033, %v1032
      %v1064 = vpack.c.bf16 %v1035, %v1034
      %v1065 = vpack.c.bf16 %v1037, %v1036
      %v1066 = vpack.c.bf16 %v1039, %v1038
      %v1067 = vpack.c.bf16 %v1041, %v1040
      %v1068 = vpack.c.bf16 %v1043, %v1042
      %v1069 = vpack.c.bf16 %v1045, %v1044
      %v1070 = vpack.c.bf16 %v1047, %v1046
      %v1071 = vpack.c.bf16 %v1049, %v1048
      %v1072 = vpack.c.bf16 %v1051, %v1050
      %v1073 = vpack.c.bf16 %v1053, %v1052
      %v1074 = vpack.c.bf16 %v1055, %v1054
      %v1075 = vpack.c.bf16 %v1057, %v1056
      %v1076 = vpack.c.bf16 %v1059, %v1058
      %v1077 = vpack.c.bf16 %v1061, %v1060
      %s1078 = scalar_lea.vmem %s2, 128
      %v1079 = vld [vmem:[%s1078] sm:$0xf]
      %v1080 = vld [vmem:[%s1078 + $0x4] sm:$0xf]
      %v1081 = vld [vmem:[%s1078 + $0x8] sm:$0xf]
      %v1082 = vld [vmem:[%s1078 + $0xc] sm:$0xf]
      %v1083 = vld [vmem:[%s1078 + $0x10] sm:$0xf]
      %v1084 = vld [vmem:[%s1078 + $0x14] sm:$0xf]
      %v1085 = vld [vmem:[%s1078 + $0x18] sm:$0xf]
      %v1086 = vld [vmem:[%s1078 + $0x1c] sm:$0xf]
      %v1087 = vld [vmem:[%s1078 + $0x20] sm:$0xf]
      %v1088 = vld [vmem:[%s1078 + $0x24] sm:$0xf]
      %v1089 = vld [vmem:[%s1078 + $0x28] sm:$0xf]
      %v1090 = vld [vmem:[%s1078 + $0x2c] sm:$0xf]
      %v1091 = vld [vmem:[%s1078 + $0x30] sm:$0xf]
      %v1092 = vld [vmem:[%s1078 + $0x34] sm:$0xf]
      %v1093 = vld [vmem:[%s1078 + $0x38] sm:$0xf]
      %v1094 = vld [vmem:[%s1078 + $0x3c] sm:$0xf]
      %v1095 = vld [vmem:[%s3 + $0x3] sm:$0x1]
      %v1096 = vlaneseq
      %v1097 = vshrl.u32 %v1096, 7
      %v1098 = vsub.s32 0, %v1097
      %v1099 = vrot.slane %v1095, %v1098
      %v1116 = vunpack.c.l.b16 %v1079
      %v1117 = vunpack.c.l.b16 %v1080
      %v1118 = vunpack.c.l.b16 %v1081
      %v1119 = vunpack.c.l.b16 %v1082
      %v1120 = vunpack.c.l.b16 %v1083
      %v1121 = vunpack.c.l.b16 %v1084
      %v1122 = vunpack.c.l.b16 %v1085
      %v1123 = vunpack.c.l.b16 %v1086
      %v1124 = vunpack.c.l.b16 %v1087
      %v1125 = vunpack.c.l.b16 %v1088
      %v1126 = vunpack.c.l.b16 %v1089
      %v1127 = vunpack.c.l.b16 %v1090
      %v1128 = vunpack.c.l.b16 %v1091
      %v1129 = vunpack.c.l.b16 %v1092
      %v1130 = vunpack.c.l.b16 %v1093
      %v1131 = vunpack.c.l.b16 %v1094
      %v1132 = vpack.c.b16 %v1117, %v1116
      %v1133 = vpack.c.b16 %v1119, %v1118
      %v1134 = vpack.c.b16 %v1121, %v1120
      %v1135 = vpack.c.b16 %v1123, %v1122
      %v1136 = vpack.c.b16 %v1125, %v1124
      %v1137 = vpack.c.b16 %v1127, %v1126
      %v1138 = vpack.c.b16 %v1129, %v1128
      %v1139 = vpack.c.b16 %v1131, %v1130
      %1148 = vmatprep.subr.bf16.mxu0 0
      %1149 = vmatpush1.bf16.msra.mxu0 %v1139
      %1150 = vmatprep.subr.bf16.mxu0 0
      %1151 = vmatpush1.bf16.msra.mxu0 %v1138
      %1152 = vmatprep.subr.bf16.mxu0 0
      %1153 = vmatpush1.bf16.msra.mxu0 %v1137
      %1154 = vmatprep.subr.bf16.mxu0 0
      %1155 = vmatpush1.bf16.msra.mxu0 %v1136
      %1156 = vmatprep.subr.bf16.mxu0 0
      %1157 = vmatpush1.bf16.msra.mxu0 %v1135
      %1158 = vmatprep.subr.bf16.mxu0 0
      %1159 = vmatpush1.bf16.msra.mxu0 %v1134
      %1160 = vmatprep.subr.bf16.mxu0 0
      %1161 = vmatpush1.bf16.msra.mxu0 %v1133
      %1162 = vmatprep.subr.bf16.mxu0 0
      %1163 = vmatpush1.bf16.msra.mxu0 %v1132
      %1164 = vmatprep.subr.bf16.mxu0 0
      %1165 = vmatpush2.bf16.msra.mxu0 0
      %1166 = vmatprep.subr.bf16.mxu0 0
      %1167 = vmatpush2.bf16.msra.mxu0 0
      %1168 = vmatprep.subr.bf16.mxu0 0
      %1169 = vmatpush2.bf16.msra.mxu0 0
      %1170 = vmatprep.subr.bf16.mxu0 0
      %1171 = vmatpush2.bf16.msra.mxu0 0
      %1172 = vmatprep.subr.bf16.mxu0 0
      %1173 = vmatpush2.bf16.msra.mxu0 0
      %1174 = vmatprep.subr.bf16.mxu0 0
      %1175 = vmatpush2.bf16.msra.mxu0 0
      %1176 = vmatprep.subr.bf16.mxu0 0
      %1177 = vmatpush2.bf16.msra.mxu0 0
      %1178 = vmatprep.subr.bf16.mxu0 0
      %1179 = vmatpush2.bf16.msra.mxu0 0
      %1180 = vmatprep.mubr.bf16.mxu0 0
      %1181 = vmatmul.mubr.bf16.gmra.mxu0 %v1062
      %v1182 = vpop.f32.mrf.mxu0
      %v1183 = vadd.f32 %v1099, %v1182
      %v1184 = vpop.f32.mrf.mxu0
      %v1185 = vpop.f32.mrf.mxu0
      %v1186 = vadd.f32 %v1099, %v1185
      %v1187 = vpop.f32.mrf.mxu0
      %1188 = vmatprep.mubr.bf16.mxu0 0
      %1189 = vmatmul.mubr.bf16.gmra.mxu0 %v1063
      %v1190 = vpop.f32.mrf.mxu0
      %v1191 = vadd.f32 %v1099, %v1190
      %v1192 = vpop.f32.mrf.mxu0
      %v1193 = vpop.f32.mrf.mxu0
      %v1194 = vadd.f32 %v1099, %v1193
      %v1195 = vpop.f32.mrf.mxu0
      %1196 = vmatprep.mubr.bf16.mxu0 0
      %1197 = vmatmul.mubr.bf16.gmra.mxu0 %v1064
      %v1198 = vpop.f32.mrf.mxu0
      %v1199 = vadd.f32 %v1099, %v1198
      %v1200 = vpop.f32.mrf.mxu0
      %v1201 = vpop.f32.mrf.mxu0
      %v1202 = vadd.f32 %v1099, %v1201
      %v1203 = vpop.f32.mrf.mxu0
      %1204 = vmatprep.mubr.bf16.mxu0 0
      %1205 = vmatmul.mubr.bf16.gmra.mxu0 %v1065
      %v1206 = vpop.f32.mrf.mxu0
      %v1207 = vadd.f32 %v1099, %v1206
      %v1208 = vpop.f32.mrf.mxu0
      %v1209 = vpop.f32.mrf.mxu0
      %v1210 = vadd.f32 %v1099, %v1209
      %v1211 = vpop.f32.mrf.mxu0
      %1212 = vmatprep.mubr.bf16.mxu0 0
      %1213 = vmatmul.mubr.bf16.gmra.mxu0 %v1066
      %v1214 = vpop.f32.mrf.mxu0
      %v1215 = vadd.f32 %v1099, %v1214
      %v1216 = vpop.f32.mrf.mxu0
      %v1217 = vpop.f32.mrf.mxu0
      %v1218 = vadd.f32 %v1099, %v1217
      %v1219 = vpop.f32.mrf.mxu0
      %1220 = vmatprep.mubr.bf16.mxu0 0
      %1221 = vmatmul.mubr.bf16.gmra.mxu0 %v1067
      %v1222 = vpop.f32.mrf.mxu0
      %v1223 = vadd.f32 %v1099, %v1222
      %v1224 = vpop.f32.mrf.mxu0
      %v1225 = vpop.f32.mrf.mxu0
      %v1226 = vadd.f32 %v1099, %v1225
      %v1227 = vpop.f32.mrf.mxu0
      %1228 = vmatprep.mubr.bf16.mxu0 0
      %1229 = vmatmul.mubr.bf16.gmra.mxu0 %v1068
      %v1230 = vpop.f32.mrf.mxu0
      %v1231 = vadd.f32 %v1099, %v1230
      %v1232 = vpop.f32.mrf.mxu0
      %v1233 = vpop.f32.mrf.mxu0
      %v1234 = vadd.f32 %v1099, %v1233
      %v1235 = vpop.f32.mrf.mxu0
      %1236 = vmatprep.mubr.bf16.mxu0 0
      %1237 = vmatmul.mubr.bf16.gmra.mxu0 %v1069
      %v1238 = vpop.f32.mrf.mxu0
      %v1239 = vadd.f32 %v1099, %v1238
      %v1240 = vpop.f32.mrf.mxu0
      %v1241 = vpop.f32.mrf.mxu0
      %v1242 = vadd.f32 %v1099, %v1241
      %v1243 = vpop.f32.mrf.mxu0
      %1244 = vmatprep.mubr.bf16.mxu0 0
      %1245 = vmatmul.mubr.bf16.gmra.mxu0 %v1070
      %v1246 = vpop.f32.mrf.mxu0
      %v1247 = vadd.f32 %v1099, %v1246
      %v1248 = vpop.f32.mrf.mxu0
      %v1249 = vpop.f32.mrf.mxu0
      %v1250 = vadd.f32 %v1099, %v1249
      %v1251 = vpop.f32.mrf.mxu0
      %1252 = vmatprep.mubr.bf16.mxu0 0
      %1253 = vmatmul.mubr.bf16.gmra.mxu0 %v1071
      %v1254 = vpop.f32.mrf.mxu0
      %v1255 = vadd.f32 %v1099, %v1254
      %v1256 = vpop.f32.mrf.mxu0
      %v1257 = vpop.f32.mrf.mxu0
      %v1258 = vadd.f32 %v1099, %v1257
      %v1259 = vpop.f32.mrf.mxu0
      %1260 = vmatprep.mubr.bf16.mxu0 0
      %1261 = vmatmul.mubr.bf16.gmra.mxu0 %v1072
      %v1262 = vpop.f32.mrf.mxu0
      %v1263 = vadd.f32 %v1099, %v1262
      %v1264 = vpop.f32.mrf.mxu0
      %v1265 = vpop.f32.mrf.mxu0
      %v1266 = vadd.f32 %v1099, %v1265
      %v1267 = vpop.f32.mrf.mxu0
      %1268 = vmatprep.mubr.bf16.mxu0 0
      %1269 = vmatmul.mubr.bf16.gmra.mxu0 %v1073
      %v1270 = vpop.f32.mrf.mxu0
      %v1271 = vadd.f32 %v1099, %v1270
      %v1272 = vpop.f32.mrf.mxu0
      %v1273 = vpop.f32.mrf.mxu0
      %v1274 = vadd.f32 %v1099, %v1273
      %v1275 = vpop.f32.mrf.mxu0
      %1276 = vmatprep.mubr.bf16.mxu0 0
      %1277 = vmatmul.mubr.bf16.gmra.mxu0 %v1074
      %v1278 = vpop.f32.mrf.mxu0
      %v1279 = vadd.f32 %v1099, %v1278
      %v1280 = vpop.f32.mrf.mxu0
      %v1281 = vpop.f32.mrf.mxu0
      %v1282 = vadd.f32 %v1099, %v1281
      %v1283 = vpop.f32.mrf.mxu0
      %1284 = vmatprep.mubr.bf16.mxu0 0
      %1285 = vmatmul.mubr.bf16.gmra.mxu0 %v1075
      %v1286 = vpop.f32.mrf.mxu0
      %v1287 = vadd.f32 %v1099, %v1286
      %v1288 = vpop.f32.mrf.mxu0
      %v1289 = vpop.f32.mrf.mxu0
      %v1290 = vadd.f32 %v1099, %v1289
      %v1291 = vpop.f32.mrf.mxu0
      %1292 = vmatprep.mubr.bf16.mxu0 0
      %1293 = vmatmul.mubr.bf16.gmra.mxu0 %v1076
      %v1294 = vpop.f32.mrf.mxu0
      %v1295 = vadd.f32 %v1099, %v1294
      %v1296 = vpop.f32.mrf.mxu0
      %v1297 = vpop.f32.mrf.mxu0
      %v1298 = vadd.f32 %v1099, %v1297
      %v1299 = vpop.f32.mrf.mxu0
      %1300 = vmatprep.mubr.bf16.mxu0 0
      %1301 = vmatmul.mubr.bf16.gmra.mxu0 %v1077
      %v1302 = vpop.f32.mrf.mxu0
      %v1303 = vadd.f32 %v1099, %v1302
      %v1304 = vpop.f32.mrf.mxu0
      %v1305 = vpop.f32.mrf.mxu0
      %v1306 = vadd.f32 %v1099, %v1305
      %v1307 = vpop.f32.mrf.mxu0
      %1308 = vdwg.mxu0
      %1309 = vst [vmem:[%s199] sm:$0xff] %v1183
      %1310 = vst [vmem:[%s199 + $0x8] sm:$0xff] %v1186
      %1311 = vst [vmem:[%s199 + $0x10] sm:$0xff] %v1191
      %1312 = vst [vmem:[%s199 + $0x18] sm:$0xff] %v1194
      %1313 = vst [vmem:[%s199 + $0x20] sm:$0xff] %v1199
      %1314 = vst [vmem:[%s199 + $0x28] sm:$0xff] %v1202
      %1315 = vst [vmem:[%s199 + $0x30] sm:$0xff] %v1207
      %1316 = vst [vmem:[%s199 + $0x38] sm:$0xff] %v1210
      %1317 = vst [vmem:[%s199 + $0x40] sm:$0xff] %v1215
      %1318 = vst [vmem:[%s199 + $0x48] sm:$0xff] %v1218
      %1319 = vst [vmem:[%s199 + $0x50] sm:$0xff] %v1223
      %1320 = vst [vmem:[%s199 + $0x58] sm:$0xff] %v1226
      %1321 = vst [vmem:[%s199 + $0x60] sm:$0xff] %v1231
      %1322 = vst [vmem:[%s199 + $0x68] sm:$0xff] %v1234
      %1323 = vst [vmem:[%s199 + $0x70] sm:$0xff] %v1239
      %1324 = vst [vmem:[%s199 + $0x78] sm:$0xff] %v1242
      %1325 = vst [vmem:[%s199 + $0x80] sm:$0xff] %v1247
      %1326 = vst [vmem:[%s199 + $0x88] sm:$0xff] %v1250
      %1327 = vst [vmem:[%s199 + $0x90] sm:$0xff] %v1255
      %1328 = vst [vmem:[%s199 + $0x98] sm:$0xff] %v1258
      %1329 = vst [vmem:[%s199 + $0xa0] sm:$0xff] %v1263
      %1330 = vst [vmem:[%s199 + $0xa8] sm:$0xff] %v1266
      %1331 = vst [vmem:[%s199 + $0xb0] sm:$0xff] %v1271
      %1332 = vst [vmem:[%s199 + $0xb8] sm:$0xff] %v1274
      %1333 = vst [vmem:[%s199 + $0xc0] sm:$0xff] %v1279
      %1334 = vst [vmem:[%s199 + $0xc8] sm:$0xff] %v1282
      %1335 = vst [vmem:[%s199 + $0xd0] sm:$0xff] %v1287
      %1336 = vst [vmem:[%s199 + $0xd8] sm:$0xff] %v1290
      %1337 = vst [vmem:[%s199 + $0xe0] sm:$0xff] %v1295
      %1338 = vst [vmem:[%s199 + $0xe8] sm:$0xff] %v1298
      %1339 = vst [vmem:[%s199 + $0xf0] sm:$0xff] %v1303
      %1340 = vst [vmem:[%s199 + $0xf8] sm:$0xff] %v1306
      %s1341 = smul.u32 32, %s15
      %p1342 = scmp.lt.s32.totalorder %s1341, 63
      %s1343 = scalar_select %p1342, %s1341, 63
      %s1344 = smul.addr %s1343, 8
      %s1345 = scalar_lea.vmem %s4, %s1344
      // Predicated region
      $region37: #{nn_forward.1} parent=35 // pred_check
        %p1346 = pneg %p122
      $region38: #{nn_forward.1} parent=35 // pred_check_branch
        %1348 = sbr.rel (%p1346) target = $region40
      $region39: #{nn_forward.1} parent=35 // pred_region
        %s1349 = smul.u32 32, %s15
      $region40: #{nn_forward.1} parent=35 // pred_fallthru
        _
    $region36: #{nn_forward.1} parent=5 // pred_fallthru
      _
    %p1350 = scmp.le.s32.totalorder 2, %s10
    // Predicated region
    $region41: #{nn_forward.1} parent=5 // pred_check
      %p1351 = pneg %p1350
    $region42: #{nn_forward.1} parent=5 // pred_check_branch
      %1353 = sbr.rel (%p1351) target = $region44
    $region43: #{nn_forward.1} parent=5 // pred_region
      %s1354 = ssub.s32 %s10, 2
      // Predicated region
      $region45: #{nn_forward.1} parent=43 // pred_check
        %p1355 = pneg %p128
      $region46: #{nn_forward.1} parent=43 // pred_check_branch
        %1357 = sbr.rel (%p1355) target = $region48
      $region47: #{nn_forward.1} parent=43 // pred_region
        %s1358 = smul.u32 32, %s16
        %p1359 = scmp.lt.s32.totalorder %s1358, 63
        %s1360 = scalar_select %p1359, %s1358, 63
        %s1361 = smul.addr %s1360, 8
        %s1362 = scalar_lea.vmem %s4, %s1361
      $region48: #{nn_forward.1} parent=43 // pred_fallthru
        _
    $region44: #{nn_forward.1} parent=5 // pred_fallthru
      _
  $region6: #{nn_forward.1} parent=0 // loop_footer
    %s14 = sadd.s32 1, %s10
  $region7: #{nn_forward.1} parent=0 // loop_footer_branch
    %9 = sbr.rel target = $region3
  $region8: #{nn_forward.1} parent=0 // loop_exit
    _

</llo_original>
